<compile_context>
chip_gen: v5e
topology: v5e:2x2
jax: 0.10.0
libtpu: 0.0.40
codegen_flags: <defaults>
</compile_context>

<pallas_src>
import jax
import jax.numpy as jnp
from jax.experimental import pallas as pl
from jax.experimental.pallas import tpu as pltpu

_CK_MAX = 256  # C_in reduction chunk size


def _aspp_pool_kernel(x_ref, w_ref, bias_ref, o_ref, acc_ref):
    # x_ref:    (1, CK, HW)    input chunk (lane-dense: HW on the lane axis)
    # w_ref:    (C_out, CK)    conv weight with BN scale and 1/(H*W) folded in (f32)
    # bias_ref: (C_out, 1)     folded BN bias (f32)
    # o_ref:    (1, C_out, HW) output tile (resident across the k axis)
    # acc_ref:  (C_out, 1)     f32 accumulator scratch
    k = pl.program_id(1)

    @pl.when(k == 0)
    def _init():
        acc_ref[...] = jnp.zeros_like(acc_ref)

    x = x_ref[0]                                   # (CK, HW), input dtype
    hw = x.shape[-1]
    # Spatial sum on the MXU (f32 accumulation), keeps the XLU free.
    ones_col = jnp.ones((hw, 1), dtype=x.dtype)
    pooled = jnp.dot(x, ones_col, preferred_element_type=jnp.float32)    # (CK, 1)
    acc_ref[...] += jnp.dot(w_ref[...], pooled,
                            preferred_element_type=jnp.float32)          # (C_out, 1)

    @pl.when(k == pl.num_programs(1) - 1)
    def _finalize():
        y = jnp.maximum(acc_ref[...] + bias_ref[...], 0.0)               # (C_out, 1)
        # bilinear upsample of a 1x1 map (align_corners=False) == broadcast
        o_ref[...] = jnp.broadcast_to(y[None, :, :], o_ref.shape).astype(o_ref.dtype)


def aspp_pool_forward(x, conv_w, bn_gamma, bn_beta, bn_mean, bn_var, eps=1e-5):
    """x: (N, C_in, H, W); conv_w: (C_out, C_in, 1, 1). Returns (N, C_out, H, W)."""
    N, C_in, H, W = x.shape
    C_out = conv_w.shape[0]
    HW = H * W
    itemsize = jnp.dtype(x.dtype).itemsize

    # --- host-side glue (runs once) ---------------------------------------
    # Fold eval-mode BatchNorm and the 1/(H*W) mean factor into the conv weight.
    scale = (bn_gamma / jnp.sqrt(bn_var + eps)).astype(jnp.float32)        # (C_out,)
    w = conv_w.reshape(C_out, C_in).astype(jnp.float32)
    w_folded = w * scale[:, None] * (1.0 / HW)                             # (C_out, C_in)
    bias = (bn_beta.astype(jnp.float32)
            - bn_mean.astype(jnp.float32) * scale).reshape(C_out, 1)       # (C_out, 1)

    # Lane-dense layout: flatten spatial dims (free reshape for contiguous NCHW).
    x_flat = x.reshape(N, C_in, HW)

    # Chunk the C_in reduction; zero-pad if needed (zeros contribute nothing).
    ck = C_in if C_in <= _CK_MAX else _CK_MAX
    c_pad = (-C_in) % ck
    if c_pad:
        x_flat = jnp.pad(x_flat, ((0, 0), (0, c_pad), (0, 0)))
        w_folded = jnp.pad(w_folded, ((0, 0), (0, c_pad)))
    c_in_p = C_in + c_pad
    k_steps = c_in_p // ck

    # VMEM budget derived from the chosen blocks (double-buffered), with margin.
    vmem_need = 2 * (ck * HW * itemsize          # x chunk
                     + C_out * HW * itemsize     # output tile
                     + C_out * ck * 4)           # weight chunk
    vmem_limit = int(min(max(vmem_need * 3 // 2 + (1 << 20), 8 << 20), 48 << 20))

    # Pure-bandwidth op: tell XLA so it can overlap surrounding work.
    cost = pl.CostEstimate(
        flops=int(2 * N * (c_in_p * HW + c_in_p * C_out)),
        transcendentals=0,
        bytes_accessed=int(N * c_in_p * HW * itemsize        # read x
                           + N * C_out * HW * itemsize       # write out
                           + C_out * c_in_p * 4 + C_out * 4),
    )

    out_flat = pl.pallas_call(
        _aspp_pool_kernel,
        out_shape=jax.ShapeDtypeStruct((N, C_out, HW), x.dtype),
        grid_spec=pltpu.PrefetchScalarGridSpec(
            num_scalar_prefetch=0,
            grid=(N, k_steps),
            in_specs=[
                pl.BlockSpec((1, ck, HW), lambda n, k: (n, k, 0)),
                pl.BlockSpec((C_out, ck), lambda n, k: (0, k)),
                pl.BlockSpec((C_out, 1), lambda n, k: (0, 0)),
            ],
            out_specs=pl.BlockSpec((1, C_out, HW), lambda n, k: (n, 0, 0)),
            scratch_shapes=[pltpu.VMEM((C_out, 1), jnp.float32)],
        ),
        compiler_params=pltpu.CompilerParams(
            dimension_semantics=("parallel", "arbitrary"),
            vmem_limit_bytes=vmem_limit,
        ),
        cost_estimate=cost,
    )(x_flat, w_folded, bias)

    return out_flat.reshape(N, C_out, H, W)


def aspp_pool_reference(x, conv_w, bn_gamma, bn_beta, bn_mean, bn_var, eps=1e-5):
    """Pure-JAX reference mirroring the PyTorch module (eval-mode BN)."""
    N, C_in, H, W = x.shape
    C_out = conv_w.shape[0]
    pooled = jnp.mean(x.astype(jnp.float32), axis=(2, 3))                  # (N, C_in)
    y = pooled @ conv_w.reshape(C_out, C_in).T.astype(jnp.float32)         # (N, C_out)
    y = (y - bn_mean) / jnp.sqrt(bn_var + eps) * bn_gamma + bn_beta
    y = jnp.maximum(y, 0.0)
    return jnp.broadcast_to(y[:, :, None, None], (N, C_out, H, W)).astype(x.dtype)


def _make_params(key, C_in, C_out):
    k_w, k_g, k_b, k_m, k_v = jax.random.split(key, 5)
    conv_w = jax.random.normal(k_w, (C_out, C_in, 1, 1), dtype=jnp.float32) * 0.5
    bn_gamma = 1.0 + 0.1 * jax.random.normal(k_g, (C_out,), dtype=jnp.float32)
    bn_beta = 0.1 * jax.random.normal(k_b, (C_out,), dtype=jnp.float32)
    bn_mean = 0.1 * jax.random.normal(k_m, (C_out,), dtype=jnp.float32)
    bn_var = jnp.abs(jax.random.normal(k_v, (C_out,), dtype=jnp.float32)) + 0.5
    return conv_w, bn_gamma, bn_beta, bn_mean, bn_var


if __name__ == "__main__":
    key = jax.random.PRNGKey(0)
    k1, k2, k3, k4 = jax.random.split(key, 4)

    # Primary test: small shapes matching the module defaults.
    N, C_in, C_out, H, W = 2, 4, 8, 16, 16
    x = jax.random.normal(k1, (N, C_in, H, W), dtype=jnp.float32)
    params = _make_params(k2, C_in, C_out)
    out = jax.block_until_ready(aspp_pool_forward(x, *params))
    ref = aspp_pool_reference(x, *params)
    assert out.shape == (N, C_out, H, W)
    assert jnp.allclose(out, ref, atol=1e-4, rtol=1e-4), "mismatch vs reference (small)"

    # Secondary test: C_in > chunk size, exercises the chunked reduction + padding.
    N2, C_in2, C_out2, H2, W2 = 1, 260, 8, 16, 16
    x2 = jax.random.normal(k3, (N2, C_in2, H2, W2), dtype=jnp.float32)
    params2 = _make_params(k4, C_in2, C_out2)
    out2 = jax.block_until_ready(aspp_pool_forward(x2, *params2))
    ref2 = aspp_pool_reference(x2, *params2)
    assert out2.shape == (N2, C_out2, H2, W2)
    assert jnp.allclose(out2, ref2, atol=1e-3, rtol=1e-3), "mismatch vs reference (chunked)"

    print("KERNEL_OK")
</pallas_src>

<mosaic_0001>
module attributes {stable_mosaic.version = 11 : i64} {
  func.func @_aspp_pool_kernel(%arg0: i32, %arg1: i32, %arg2: memref<1x4x256xf32, #tpu.memory_space<vmem>>, %arg3: memref<8x4xf32, #tpu.memory_space<vmem>>, %arg4: memref<8x1xf32, #tpu.memory_space<vmem>>, %arg5: memref<1x8x256xf32, #tpu.memory_space<vmem>>, %arg6: memref<8x1xf32, #tpu.memory_space<vmem>>) attributes {dimension_semantics = [#tpu.dimension_semantics<parallel>, #tpu.dimension_semantics<arbitrary>], iteration_bounds = array<i64: 2, 1>, scalar_prefetch = 0 : i64, scratch_operands = 1 : i64, tpu.core_type = #tpu.core_type<tc>, window_params = [{transform_indices = @transform_0, window_bounds = array<i64: 1, 4, 256>}, {transform_indices = @transform_1, window_bounds = array<i64: 8, 4>}, {pipeline_mode = #tpu.pipeline_mode<synchronous>, transform_indices = @transform_2, window_bounds = array<i64: 8, 1>}, {transform_indices = @transform_3, window_bounds = array<i64: 1, 8, 256>}]} {
    %c0_i32 = arith.constant 0 : i32
    %0 = arith.cmpi eq, %arg1, %c0_i32 : i32
    %1 = arith.extui %0 : i1 to i32
    %c0_i32_0 = arith.constant 0 : i32
    %2 = arith.cmpi ne, %1, %c0_i32_0 : i32
    scf.if %2 {
      %cst_13 = arith.constant 0.000000e+00 : f32
      %15 = vector.broadcast %cst_13 : f32 to vector<8x1xf32>
      %c0_14 = arith.constant 0 : index
      %c0_15 = arith.constant 0 : index
      %16 = vector.load %arg6[%c0_14, %c0_15] : memref<8x1xf32, #tpu.memory_space<vmem>>, vector<8x1xf32>
      tpu.vector_store %arg6[%c0_14, %c0_15], %15 {strides = array<i32>} : memref<8x1xf32, #tpu.memory_space<vmem>>, vector<8x1xf32>,
    } else {
    }
    %c0 = arith.constant 0 : index
    %c0_1 = arith.constant 0 : index
    %c0_2 = arith.constant 0 : index
    %3 = vector.load %arg2[%c0, %c0_1, %c0_2] : memref<1x4x256xf32, #tpu.memory_space<vmem>>, vector<1x4x256xf32>
    %4 = vector.shape_cast %3 : vector<1x4x256xf32> to vector<4x256xf32>
    %cst = arith.constant 1.000000e+00 : f32
    %5 = vector.broadcast %cst : f32 to vector<256x1xf32>
    %cst_3 = arith.constant dense<0.000000e+00> : vector<4x1xf32>
    %6 = tpu.matmul %4, %5, %cst_3 {dimension_numbers = #tpu.dot_dimension_numbers<[1], [0], [0], [1], [0, 0, 1, 1], [], []>} : vector<4x256xf32>, vector<256x1xf32>, vector<4x1xf32> -> vector<4x1xf32>
    %c0_4 = arith.constant 0 : index
    %c0_5 = arith.constant 0 : index
    %7 = vector.load %arg6[%c0_4, %c0_5] : memref<8x1xf32, #tpu.memory_space<vmem>>, vector<8x1xf32>
    %c0_6 = arith.constant 0 : index
    %c0_7 = arith.constant 0 : index
    %8 = vector.load %arg3[%c0_6, %c0_7] : memref<8x4xf32, #tpu.memory_space<vmem>>, vector<8x4xf32>
    %cst_8 = arith.constant dense<0.000000e+00> : vector<8x1xf32>
    %9 = tpu.matmul %8, %6, %cst_8 {dimension_numbers = #tpu.dot_dimension_numbers<[1], [0], [0], [1], [0, 0, 1, 1], [], []>} : vector<8x4xf32>, vector<4x1xf32>, vector<8x1xf32> -> vector<8x1xf32>
    %10 = arith.addf %7, %9 : vector<8x1xf32>
    %c0_9 = arith.constant 0 : index
    %c0_10 = arith.constant 0 : index
    %11 = vector.load %arg6[%c0_9, %c0_10] : memref<8x1xf32, #tpu.memory_space<vmem>>, vector<8x1xf32>
    tpu.vector_store %arg6[%c0_9, %c0_10], %10 {strides = array<i32>} : memref<8x1xf32, #tpu.memory_space<vmem>>, vector<8x1xf32>,
    %c0_i32_11 = arith.constant 0 : i32
    %12 = arith.cmpi eq, %arg1, %c0_i32_11 : i32
    %13 = arith.extui %12 : i1 to i32
    %c0_i32_12 = arith.constant 0 : i32
    %14 = arith.cmpi ne, %13, %c0_i32_12 : i32
    scf.if %14 {
      %c0_13 = arith.constant 0 : index
      %c0_14 = arith.constant 0 : index
      %15 = vector.load %arg6[%c0_13, %c0_14] : memref<8x1xf32, #tpu.memory_space<vmem>>, vector<8x1xf32>
      %c0_15 = arith.constant 0 : index
      %c0_16 = arith.constant 0 : index
      %16 = vector.load %arg4[%c0_15, %c0_16] : memref<8x1xf32, #tpu.memory_space<vmem>>, vector<8x1xf32>
      %17 = arith.addf %15, %16 : vector<8x1xf32>
      %cst_17 = arith.constant 0.000000e+00 : f32
      %18 = vector.broadcast %cst_17 : f32 to vector<8x1xf32>
      %19 = arith.maximumf %17, %18 : vector<8x1xf32>
      %20 = vector.shape_cast %19 : vector<8x1xf32> to vector<1x8x1xf32>
      %21 = vector.shape_cast %20 : vector<1x8x1xf32> to vector<1x8x1xf32>
      %22 = vector.broadcast %21 : vector<1x8x1xf32> to vector<1x8x256xf32>
      %c0_18 = arith.constant 0 : index
      %c0_19 = arith.constant 0 : index
      %c0_20 = arith.constant 0 : index
      %23 = vector.load %arg5[%c0_18, %c0_19, %c0_20] : memref<1x8x256xf32, #tpu.memory_space<vmem>>, vector<1x8x256xf32>
      tpu.vector_store %arg5[%c0_18, %c0_19, %c0_20], %22 {strides = array<i32>} : memref<1x8x256xf32, #tpu.memory_space<vmem>>, vector<1x8x256xf32>,
    } else {
    }
    return
  }
  func.func @transform_0(%arg0: i32, %arg1: i32) -> (i32, i32, i32) {
    %c0_i32 = arith.constant 0 : i32
    %c0_i32_0 = arith.constant 0 : i32
    return %arg0, %arg1, %c0_i32 : i32, i32, i32
  }
  func.func @transform_1(%arg0: i32, %arg1: i32) -> (i32, i32) {
    %c0_i32 = arith.constant 0 : i32
    %c0_i32_0 = arith.constant 0 : i32
    return %c0_i32, %arg1 : i32, i32
  }
  func.func @transform_2(%arg0: i32, %arg1: i32) -> (i32, i32) {
    %c0_i32 = arith.constant 0 : i32
    %c0_i32_0 = arith.constant 0 : i32
    %c0_i32_1 = arith.constant 0 : i32
    return %c0_i32, %c0_i32_0 : i32, i32
  }
  func.func @transform_3(%arg0: i32, %arg1: i32) -> (i32, i32, i32) {
    %c0_i32 = arith.constant 0 : i32
    %c0_i32_0 = arith.constant 0 : i32
    %c0_i32_1 = arith.constant 0 : i32
    return %arg0, %c0_i32, %c0_i32_0 : i32, i32, i32
  }
}

</mosaic_0001>

<llo_original>
// kernel: tpu_custom_call.1
$region0: #{tpu_custom_call.1}
  #allocation0 [shape = 'u32[]', space=smem, size = 0x4, offset = 0x4, fixed_abs, tag = 'smem constant byte address 0x4 - core index']
  #allocation1 [shape = 'u32[72,128]{1,0:T(1,128)}', space=vmem, size = 0x9000, scoped, tag = 'internal scratch']
  #allocation2 [shape = 'f32[8,1]{1,0:T(8,128)}', space=vmem, size = 0x1000, scoped, tag = 'scratch operand']
  %s0 = inlined_call_operand.vmem [shape: f32[2,4,256], index: 0, kind: input, shape index: {}]
  %s1 = inlined_call_operand.vmem [shape: f32[8,4], index: 1, kind: input, shape index: {}]
  %s2 = inlined_call_operand.vmem [shape: f32[8,1], index: 2, kind: input, shape index: {}]
  %s3 = inlined_call_operand.hbm [shape: f32[2,8,256], index: 3, kind: output, shape index: {}]
  %s4 = sld [smem:[#allocation0]]
  $region53: #{tpu_custom_call.1} parent=0
    _
  %s6 = ssub.s32 1, %s4
  %s7 = scalar_select 0, %s6, %s4
  $region1: #{tpu_custom_call.1} parent=0
    #allocation3 [shape = 'u8[16384]{0}', space=vmem, size = 0x4000, scoped, tag = 'output window, operand 0']
    #allocation4 [shape = 's32[2]{0}', space=sflag, size = 0x8, scoped, tag = 'scoped memory for tpu_custom_call.1']
    %8 = vsyncpa [#allocation4], 0
    %s9 = scalar_lea.sflag [#allocation4], 1
    %10 = vsyncpa %s9, 0
    loop: start=0, step=1, limit=4
    $region2: #{tpu_custom_call.1} parent=1 // loop_pre_header
      _
    $region3: #{tpu_custom_call.1} parent=1 // loop_header
      %s12 = sphi 0, %s16
      %p13 = scmp.ge.s32.totalorder %s12, 4
      %s19 = sphi 0, %s31
      %s20 = sphi 0, %s27
      %s21 = sphi 0, %s19
      %s22 = sphi 0, %s20
      %s23 = sphi 0, %s21
      %s24 = sphi 0, %s22
      %s36 = sphi 0, %s38
      %s39 = sphi 0, %s36
      %s40 = sphi 0, %s39
      %s56 = sphi 0, %s40
      %s62 = sphi 0, %s64
      %s65 = sphi 0, %s62
      %s66 = sphi 0, %s65
      %s82 = sphi 0, %s66
      %s86 = sphi 0, %s86
      %s88 = sphi 0, %s86
      %s89 = sphi 0, %s88
      %s103 = sphi 0, %s89
      %s109 = sphi 0, %s111
      %s112 = sphi 0, %s109
      %s113 = sphi 0, %s112
      %s129 = sphi 0, %s113
    $region4: #{tpu_custom_call.1} parent=1 // loop_header_branch
      %15 = sbr.rel (%p13) target = $region8
    $region5: #{tpu_custom_call.1} parent=1 // loop_body
      %s17 = ssub.s32 %s12, 1
      %s18 = ssub.s32 %s12, 2
      %s25 = sadd.s32 1, %s20
      %p26 = scmp.ge.s32.totalorder %s25, 1
      %s27 = scalar_select %p26, 0, %s25
      %s28 = sadd.s32 1, %s19
      %s29 = scalar_select %p26, %s28, %s19
      %p30 = scmp.ge.s32.totalorder %s29, 2
      %s31 = scalar_select %p30, 0, %s29
      %s32 = ssub.s32 %s19, %s31
      %s33 = ssub.s32 %s20, %s27
      %s34 = sor.u32 %s32, %s33
      %p35 = scmp.eq.s32.totalorder %s34, 0
      %s37 = sadd.s32 %s36, 1
      %s38 = scalar_select %p35, %s36, %s37
      %p41 = pneg %p35
      %p42 = scmp.eq.s32.totalorder %s12, 1
      %p43 = por %p41, %p42
      %p44 = scmp.ne.s32.totalorder %s36, %s39
      %p45 = scmp.eq.s32.totalorder %s12, 0
      %p46 = por %p44, %p45
      %p47 = scmp.ne.s32.totalorder %s36, %s39
      %p48 = scmp.eq.s32.totalorder %s17, 1
      %p49 = por %p47, %p48
      %p50 = scmp.ne.s32.totalorder %s39, %s40
      %p51 = scmp.eq.s32.totalorder %s17, 0
      %p52 = por %p50, %p51
      %p53 = scmp.ne.s32.totalorder %s39, %s40
      %p54 = scmp.eq.s32.totalorder %s18, 1
      %p55 = por %p53, %p54
      %p57 = scmp.ne.s32.totalorder %s40, %s56
      %p58 = scmp.eq.s32.totalorder %s18, 0
      %p59 = por %p57, %p58
      %s60 = ssub.s32 %s20, %s27
      %p61 = scmp.eq.s32.totalorder %s60, 0
      %s63 = sadd.s32 %s62, 1
      %s64 = scalar_select %p61, %s62, %s63
      %p67 = pneg %p61
      %p68 = scmp.eq.s32.totalorder %s12, 1
      %p69 = por %p67, %p68
      %p70 = scmp.ne.s32.totalorder %s62, %s65
      %p71 = scmp.eq.s32.totalorder %s12, 0
      %p72 = por %p70, %p71
      %p73 = scmp.ne.s32.totalorder %s62, %s65
      %p74 = scmp.eq.s32.totalorder %s17, 1
      %p75 = por %p73, %p74
      %p76 = scmp.ne.s32.totalorder %s65, %s66
      %p77 = scmp.eq.s32.totalorder %s17, 0
      %p78 = por %p76, %p77
      %p79 = scmp.ne.s32.totalorder %s65, %s66
      %p80 = scmp.eq.s32.totalorder %s18, 1
      %p81 = por %p79, %p80
      %p83 = scmp.ne.s32.totalorder %s66, %s82
      %p84 = scmp.eq.s32.totalorder %s18, 0
      %p85 = por %p83, %p84
      %s87 = sadd.s32 %s86, 1
      %p90 = scmp.eq.s32.totalorder %s12, 1
      %p91 = scmp.ne.s32.totalorder %s86, %s88
      %p92 = scmp.eq.s32.totalorder %s12, 0
      %p93 = por %p91, %p92
      %p94 = scmp.ne.s32.totalorder %s86, %s88
      %p95 = scmp.eq.s32.totalorder %s17, 1
      %p96 = por %p94, %p95
      %p97 = scmp.ne.s32.totalorder %s88, %s89
      %p98 = scmp.eq.s32.totalorder %s17, 0
      %p99 = por %p97, %p98
      %p100 = scmp.ne.s32.totalorder %s88, %s89
      %p101 = scmp.eq.s32.totalorder %s18, 1
      %p102 = por %p100, %p101
      %p104 = scmp.ne.s32.totalorder %s89, %s103
      %p105 = scmp.eq.s32.totalorder %s18, 0
      %p106 = por %p104, %p105
      %s107 = ssub.s32 %s19, %s31
      %p108 = scmp.eq.s32.totalorder %s107, 0
      %s110 = sadd.s32 %s109, 1
      %s111 = scalar_select %p108, %s109, %s110
      %p114 = pneg %p108
      %p115 = scmp.eq.s32.totalorder %s12, 1
      %p116 = por %p114, %p115
      %p117 = scmp.ne.s32.totalorder %s109, %s112
      %p118 = scmp.eq.s32.totalorder %s12, 0
      %p119 = por %p117, %p118
      %p120 = scmp.ne.s32.totalorder %s109, %s112
      %p121 = scmp.eq.s32.totalorder %s17, 1
      %p122 = por %p120, %p121
      %p123 = scmp.ne.s32.totalorder %s112, %s113
      %p124 = scmp.eq.s32.totalorder %s17, 0
      %p125 = por %p123, %p124
      %p126 = scmp.ne.s32.totalorder %s112, %s113
      %p127 = scmp.eq.s32.totalorder %s18, 1
      %p128 = por %p126, %p127
      %p130 = scmp.ne.s32.totalorder %s113, %s129
      %p131 = scmp.eq.s32.totalorder %s18, 0
      %p132 = por %p130, %p131
      %p133 = scmp.le.s32.totalorder 1, %s12
      %p134 = scmp.lt.s32.totalorder %s12, 3
      %p135 = pnand %p133, %p134
      %p136 = pneg %p135
      // Predicated region
      $region9: #{tpu_custom_call.1} parent=5 // pred_check
        _
      $region10: #{tpu_custom_call.1} parent=5 // pred_check_branch
        %138 = sbr.rel (%p135) target = $region12
      $region11: #{tpu_custom_call.1} parent=5 // pred_region
        %s139 = ssub.s32 %s12, 1
        // Predicated region
        $region13: #{tpu_custom_call.1} parent=11 // pred_check
          %p140 = pneg %p78
        $region14: #{tpu_custom_call.1} parent=11 // pred_check_branch
          %142 = sbr.rel (%p140) target = $region16
        $region15: #{tpu_custom_call.1} parent=11 // pred_region
          %p143 = scmp.lt.s32.totalorder %s22, 0
          %s144 = scalar_select %p143, %s22, 0
          %s145 = smul.addr %s144, 8
          %s146 = scalar_lea.vmem %s1, %s145
        $region16: #{tpu_custom_call.1} parent=11 // pred_fallthru
          _
        // Predicated region
        $region17: #{tpu_custom_call.1} parent=11 // pred_check
          %p147 = pneg %p99
        $region18: #{tpu_custom_call.1} parent=11 // pred_check_branch
          %149 = sbr.rel (%p147) target = $region20
        $region19: #{tpu_custom_call.1} parent=11 // pred_region
          _
        $region20: #{tpu_custom_call.1} parent=11 // pred_fallthru
          _
      $region12: #{tpu_custom_call.1} parent=5 // pred_fallthru
        _
      %p150 = scmp.lt.s32.totalorder %s12, 2
      // Predicated region
      $region21: #{tpu_custom_call.1} parent=5 // pred_check
        %p151 = pneg %p150
      $region22: #{tpu_custom_call.1} parent=5 // pred_check_branch
        %153 = sbr.rel (%p151) target = $region24
      $region23: #{tpu_custom_call.1} parent=5 // pred_region
        // Predicated region
        $region25: #{tpu_custom_call.1} parent=23 // pred_check
          %p154 = pneg %p46
        $region26: #{tpu_custom_call.1} parent=23 // pred_check_branch
          %156 = sbr.rel (%p154) target = $region28
        $region27: #{tpu_custom_call.1} parent=23 // pred_region
          %p157 = scmp.lt.s32.totalorder %s19, 1
          %s158 = scalar_select %p157, %s19, 1
          %p159 = scmp.lt.s32.totalorder %s20, 0
          %s160 = scalar_select %p159, %s20, 0
          %s161 = smul.addr %s160, 2
          %s162 = smul.addr %s158, 2
          %s163 = sadd.s32 %s161, %s162
          %s164 = smul.addr %s163, 4
          %s165 = scalar_lea.vmem %s0, %s164
        $region28: #{tpu_custom_call.1} parent=23 // pred_fallthru
          _
      $region24: #{tpu_custom_call.1} parent=5 // pred_fallthru
        _
      %p166 = scmp.le.s32.totalorder 1, %s12
      %p167 = scmp.lt.s32.totalorder %s12, 3
      %p168 = pnand %p166, %p167
      %p169 = pneg %p168
      // Predicated region
      $region29: #{tpu_custom_call.1} parent=5 // pred_check
        _
      $region30: #{tpu_custom_call.1} parent=5 // pred_check_branch
        %171 = sbr.rel (%p168) target = $region32
      $region31: #{tpu_custom_call.1} parent=5 // pred_region
        %s172 = ssub.s32 %s12, 1
        %p173 = scmp.lt.s32.totalorder %s21, 1
        %s174 = scalar_select %p173, %s21, 1
        %p175 = scmp.lt.s32.totalorder %s22, 0
        %s176 = scalar_select %p175, %s22, 0
        %s177 = smul.addr %s176, 2
        %s178 = smul.addr %s174, 2
        %s179 = sadd.s32 %s177, %s178
        %s180 = smul.addr %s179, 4
        %s181 = scalar_lea.vmem %s0, %s180
        %p182 = pneg %p52
        %p183 = pneg %p49
        %p184 = scmp.lt.s32.totalorder %s22, 0
        %s185 = scalar_select %p184, %s22, 0
        %s186 = smul.addr %s185, 8
        %s187 = scalar_lea.vmem %s1, %s186
        %p188 = pneg %p78
        %p189 = pneg %p75
        %p190 = pneg %p99
        %p191 = pneg %p96
        %p192 = pneg %p125
        %p193 = pneg %p122
        %s194 = sand.u32 %s112, 1
        %s195 = scalar_lea.sflag [#allocation4], %s194
        %s196 = sand.u32 %s112, 1
        %s197 = smul.addr %s196, 16
        %s198 = scalar_lea.vmem [#allocation3], %s197
        %p199 = scmp.lt.s32.totalorder %s21, 1
        %s200 = scalar_select %p199, %s21, 1
        %p201 = scmp.lt.s32.totalorder %s22, 0
        %s202 = scalar_select %p201, %s22, 0
        %s203 = smul.addr %s202, 2
        %s204 = smul.addr %s200, 2
        %s205 = sadd.s32 %s203, %s204
        %s206 = smul.addr %s205, 4
        %s207 = scalar_lea.vmem %s0, %s206
        %p208 = scmp.lt.s32.totalorder %s22, 0
        %s209 = scalar_select %p208, %s22, 0
        %s210 = smul.addr %s209, 8
        %s211 = scalar_lea.vmem %s1, %s210
        %p212 = scmp.eq.s32.totalorder %s22, 0
        // Predicated region
        $region33: #{tpu_custom_call.1} parent=31 // pred_check
          %p213 = pneg %p212
        $region34: #{tpu_custom_call.1} parent=31 // pred_check_branch
          %215 = sbr.rel (%p213) target = $region36
        $region35: #{tpu_custom_call.1} parent=31 // pred_region
          %vm216 = vcmask 7168
          %217 = vst.msk [vmem:[#allocation2] sm:$0xff] %vm216, 0.0
        $region36: #{tpu_custom_call.1} parent=31 // pred_fallthru
          _
        %v218 = vld [vmem:[%s207] sm:$0xff]
        %220 = vst [vmem:[#allocation1] ss:$2 sm:$0xff] %v218
        %v221 = vld.sshfl [vmem:[#allocation1] sm:$0xff pattern:$0x75316420]
        %v222 = vld.sshfl [vmem:[#allocation1 + $0x8] sm:$0xff pattern:$0x75316420]
        %225 = vmatpush.msra.mxu0 1.0
        %226 = vmatpush.msra.mxu0 1.0
        %227 = vmatpush.msra.mxu0 1.0
        %228 = vmatpush.msra.mxu0 1.0
        %229 = vmatpush.msra.mxu0 1.0
        %230 = vmatpush.msra.mxu0 1.0
        %231 = vmatpush.msra.mxu0 1.0
        %232 = vmatpush.msra.mxu0 1.0
        %233 = vmatpush.msra.mxu0 1.0
        %234 = vmatpush.msra.mxu0 1.0
        %235 = vmatpush.msra.mxu0 1.0
        %236 = vmatpush.msra.mxu0 1.0
        %237 = vmatpush.msra.mxu0 1.0
        %238 = vmatpush.msra.mxu0 1.0
        %239 = vmatpush.msra.mxu0 1.0
        %240 = vmatpush.msra.mxu0 1.0
        %241 = vmatmul.f32.gmra.mxu0 %v221
        %v242 = vpop.f32.mrf.mxu0
        %v243 = vadd.f32 0.0, %v242
        %244 = vdwg.mxu0
        %245 = vmatpush.msra.mxu0 1.0
        %246 = vmatpush.msra.mxu0 1.0
        %247 = vmatpush.msra.mxu0 1.0
        %248 = vmatpush.msra.mxu0 1.0
        %249 = vmatpush.msra.mxu0 1.0
        %250 = vmatpush.msra.mxu0 1.0
        %251 = vmatpush.msra.mxu0 1.0
        %252 = vmatpush.msra.mxu0 1.0
        %253 = vmatpush.msra.mxu0 1.0
        %254 = vmatpush.msra.mxu0 1.0
        %255 = vmatpush.msra.mxu0 1.0
        %256 = vmatpush.msra.mxu0 1.0
        %257 = vmatpush.msra.mxu0 1.0
        %258 = vmatpush.msra.mxu0 1.0
        %259 = vmatpush.msra.mxu0 1.0
        %260 = vmatpush.msra.mxu0 1.0
        %261 = vmatmul.f32.gmra.mxu0 %v222
        %v262 = vpop.f32.mrf.mxu0
        %v263 = vadd.f32 %v243, %v262
        %264 = vdwg.mxu0
        %v265 = vld [vmem:[#allocation2] sm:$0xff]
        %v266 = vld [vmem:[%s211] sm:$0xff]
        %vm267 = vcmask 31744
        %v269 = vsel %vm267, %v266, 0
        %vm271 = vcmask 1043456
        %v273 = vsel %vm271, %v263, 0
        %275 = vmatpush.msra.mxu0 0.0
        %276 = vmatpush.msra.mxu0 0.0
        %277 = vmatpush.msra.mxu0 0.0
        %278 = vmatpush.msra.mxu0 0.0
        %279 = vmatpush.msra.mxu0 0.0
        %280 = vmatpush.msra.mxu0 0.0
        %281 = vmatpush.msra.mxu0 0.0
        %282 = vmatpush.msra.mxu0 0.0
        %283 = vmatpush.msra.mxu0 0.0
        %284 = vmatpush.msra.mxu0 0.0
        %285 = vmatpush.msra.mxu0 0.0
        %286 = vmatpush.msra.mxu0 0.0
        %287 = vmatpush.msra.mxu0 0.0
        %288 = vmatpush.msra.mxu0 0.0
        %289 = vmatpush.msra.mxu0 0.0
        %290 = vmatpush.msra.mxu0 %v273
        %291 = vmatmul.f32.gmra.mxu0 %v269
        %v292 = vpop.f32.mrf.mxu0
        %v293 = vadd.f32 0.0, %v292
        %294 = vdwg.mxu0
        %v295 = vadd.f32 %v265, %v293
        %vm296 = vcmask 7168
        %297 = vst.msk [vmem:[#allocation2] sm:$0xff] %vm296, %v295
        // Predicated region
        $region37: #{tpu_custom_call.1} parent=31 // pred_check
          %p298 = pneg %p212
        $region38: #{tpu_custom_call.1} parent=31 // pred_check_branch
          %300 = sbr.rel (%p298) target = $region40
        $region39: #{tpu_custom_call.1} parent=31 // pred_region
          %v301 = vld [vmem:[#allocation2] sm:$0xff]
          %v302 = vld [vmem:[%s2] sm:$0xff]
          %v303 = vadd.f32 %v301, %v302
          %v304 = vmax.f32 %v303, 0.0
          %306 = vset.pattern.permute.xlu0 0
          %307 = vperm.xlu0 %306, %v304
          %v308 = vpop.permute.xlu0 %307
          %310 = vst [vmem:[%s198] sm:$0xff] %v308
          %311 = vst [vmem:[%s198 + $0x8] sm:$0xff] %v308
        $region40: #{tpu_custom_call.1} parent=31 // pred_fallthru
          _
        %s312 = sand.u32 %s112, 1
        %s313 = scalar_lea.sflag [#allocation4], %s312
        %s314 = sand.u32 %s112, 1
        %s315 = smul.addr %s314, 16
        %s316 = scalar_lea.vmem [#allocation3], %s315
        // Predicated region
        $region41: #{tpu_custom_call.1} parent=31 // pred_check
          %p317 = pneg %p122
        $region42: #{tpu_custom_call.1} parent=31 // pred_check_branch
          %319 = sbr.rel (%p317) target = $region44
        $region43: #{tpu_custom_call.1} parent=31 // pred_region
          %321 = vsyncadd %s313, 0
          %s322 = smul.addr %s21, 2
          %s323 = smul.addr %s322, 8
          %s324 = scalar_lea.hbm %s3, %s323
          %s326 = sshll.u32 %s316, 4
          %s327 = int_to_ptr.vmem [resolvable:$true] %s326
          %s328 = sshll.u32 %s324, 4
          %s329 = int_to_ptr.hbm [resolvable:$true] %s328
          %331 = dma.vmem_to_hbm [thread:$0]  %s327, 256, %s329, %s313
        $region44: #{tpu_custom_call.1} parent=31 // pred_fallthru
          _
      $region32: #{tpu_custom_call.1} parent=5 // pred_fallthru
        _
      %p332 = scmp.le.s32.totalorder 2, %s12
      // Predicated region
      $region45: #{tpu_custom_call.1} parent=5 // pred_check
        %p333 = pneg %p332
      $region46: #{tpu_custom_call.1} parent=5 // pred_check_branch
        %335 = sbr.rel (%p333) target = $region48
      $region47: #{tpu_custom_call.1} parent=5 // pred_region
        %s336 = ssub.s32 %s12, 2
        // Predicated region
        $region49: #{tpu_custom_call.1} parent=47 // pred_check
          %p337 = pneg %p128
        $region50: #{tpu_custom_call.1} parent=47 // pred_check_branch
          %339 = sbr.rel (%p337) target = $region52
        $region51: #{tpu_custom_call.1} parent=47 // pred_region
          %s340 = sand.u32 %s113, 1
          %s341 = scalar_lea.sflag [#allocation4], %s340
          %s342 = sand.u32 %s113, 1
          %s343 = smul.addr %s342, 16
          %s344 = scalar_lea.vmem [#allocation3], %s343
          %346 = dma.done %s341, 256
        $region52: #{tpu_custom_call.1} parent=47 // pred_fallthru
          _
      $region48: #{tpu_custom_call.1} parent=5 // pred_fallthru
        _
    $region6: #{tpu_custom_call.1} parent=1 // loop_footer
      %s16 = sadd.s32 1, %s12
    $region7: #{tpu_custom_call.1} parent=1 // loop_footer_branch
      %11 = sbr.rel target = $region3
    $region8: #{tpu_custom_call.1} parent=1 // loop_exit
      _
    %347 = vsyncpa [#allocation4], 1
    %s348 = scalar_lea.sflag [#allocation4], 1
    %349 = vsyncpa %s348, 1

</llo_original>
